<compile_context>
chip_gen: v7x
topology: tpu7x:2x2x1
jax: 0.10.0
libtpu: 0.0.40
codegen_flags: <defaults>
</compile_context>

<pallas_src>
import jax
import jax.numpy as jnp
from jax.experimental import pallas as pl
from jax.experimental.pallas import tpu as pltpu

_LANE = 128


def _round_up(a: int, m: int) -> int:
    return ((a + m - 1) // m) * m


def _disc_kernel(x_ref, w1_ref, b1_ref, w2_ref, b2_ref, o_ref):
    """One batch tile in the transposed (lane-dense) orientation.

    x:  (D_in, TB)  input features, batch on the lane axis
    w1: (H, D_in)   PyTorch nn.Linear weight, used directly (y = W x + b)
    b1: (H, 1)
    w2: (H, 1)      second-layer weight as a column
    b2: (1, 1)
    o:  (1, TB)
    """
    x = x_ref[...]

    # Linear 1 on the MXU: (H, D_in) @ (D_in, TB) -> (H, TB)
    h = jnp.dot(w1_ref[...], x, preferred_element_type=jnp.float32) + b1_ref[...]

    # LeakyReLU(negative_slope=0.2): one vmul + vmax (no compare/select).
    h = jnp.maximum(h, 0.2 * h)

    # Linear 2 (H -> 1) as broadcast-multiply + sublane reduction (VPU + XLU);
    # avoids a second MXU push/pop for a 16x1 matmul.
    z = jnp.sum(w2_ref[...] * h, axis=0, keepdims=True) + b2_ref[...]

    # Numerically-safe sigmoid.
    o_ref[...] = jax.nn.sigmoid(z)


def classical_discriminator(x, w1, b1, w2, b2, *, block_b: int = 32768):
    """Forward pass of ClassicalDiscriminator.

    Args:
      x:  (B, input_dim)        float32
      w1: (hidden, input_dim)   float32  (PyTorch nn.Linear weight convention)
      b1: (hidden,)             float32
      w2: (1, hidden)           float32
      b2: (1,)                  float32
    Returns:
      (B, 1) float32 probabilities in (0, 1).
    """
    B, d_in = x.shape
    hidden = w1.shape[0]
    assert w1.shape == (hidden, d_in)
    assert w2.shape == (1, hidden)

    # Lane-dense layout: batch on the last (lane) axis.
    x_t = jnp.transpose(x).astype(jnp.float32)                 # (D_in, B)

    # Batch tile size: multiple of 128 lanes, clamped to the (padded) batch.
    b128 = _round_up(B, _LANE)
    tb = _round_up(min(max(block_b, _LANE), b128), _LANE)
    b_pad = _round_up(B, tb)
    if b_pad != B:
        x_t = jnp.pad(x_t, ((0, 0), (0, b_pad - B)))           # padded cols are discarded

    w1_c = w1.astype(jnp.float32)                              # (H, D_in)
    b1_c = b1.reshape(hidden, 1).astype(jnp.float32)           # (H, 1)
    w2_c = w2.reshape(hidden, 1).astype(jnp.float32)           # (H, 1) column
    b2_c = b2.reshape(1, 1).astype(jnp.float32)                # (1, 1)

    grid = (pl.cdiv(b_pad, tb),)

    out = pl.pallas_call(
        _disc_kernel,
        out_shape=jax.ShapeDtypeStruct((1, b_pad), jnp.float32),
        grid=grid,
        in_specs=[
            pl.BlockSpec((d_in, tb), lambda i: (0, i)),        # x: streamed per tile
            pl.BlockSpec((hidden, d_in), lambda i: (0, 0)),    # weights: resident
            pl.BlockSpec((hidden, 1), lambda i: (0, 0)),
            pl.BlockSpec((hidden, 1), lambda i: (0, 0)),
            pl.BlockSpec((1, 1), lambda i: (0, 0)),
        ],
        out_specs=pl.BlockSpec((1, tb), lambda i: (0, i)),     # lane-dense output
        compiler_params=pltpu.CompilerParams(
            dimension_semantics=("parallel",),                 # megacore-shard batch
            vmem_limit_bytes=32 * 1024 * 1024,
        ),
    )(x_t, w1_c, b1_c, w2_c, b2_c)

    return jnp.transpose(out[:, :B])                           # (B, 1)


def _reference(x, w1, b1, w2, b2):
    h = x @ w1.T + b1
    h = jnp.where(h >= 0, h, 0.2 * h)
    z = h @ w2.T + b2
    return jax.nn.sigmoid(z)


if __name__ == "__main__":
    input_dim, hidden_dim = 8, 16

    key = jax.random.PRNGKey(0)
    kx, kw1, kb1, kw2, kb2 = jax.random.split(key, 5)

    # Deterministic synthetic parameters (Kaiming-ish scale, not a checkpoint).
    w1 = jax.random.normal(kw1, (hidden_dim, input_dim), dtype=jnp.float32) * 0.3
    b1 = jax.random.normal(kb1, (hidden_dim,), dtype=jnp.float32) * 0.1
    w2 = jax.random.normal(kw2, (1, hidden_dim), dtype=jnp.float32) * 0.3
    b2 = jax.random.normal(kb2, (1,), dtype=jnp.float32) * 0.1

    # batch=8 is the nominal small test; batch=300 exercises lane padding +
    # the non-divisible-batch path of the tiled wrapper.
    for batch in (8, 300):
        kx, sub = jax.random.split(kx)
        x = jax.random.normal(sub, (batch, input_dim), dtype=jnp.float32)

        out = jax.block_until_ready(classical_discriminator(x, w1, b1, w2, b2))
        ref = _reference(x, w1, b1, w2, b2)

        assert out.shape == (batch, 1), out.shape
        assert jnp.allclose(out, ref, atol=1e-5, rtol=1e-5), (out, ref)

    print("KERNEL_OK")
</pallas_src>

<mosaic_0001>
module attributes {stable_mosaic.version = 11 : i64} {
  func.func @_disc_kernel(%arg0: i32, %arg1: memref<8x128xf32, #tpu.memory_space<vmem>>, %arg2: memref<16x8xf32, #tpu.memory_space<vmem>>, %arg3: memref<16x1xf32, #tpu.memory_space<vmem>>, %arg4: memref<16x1xf32, #tpu.memory_space<vmem>>, %arg5: memref<1x1xf32, #tpu.memory_space<vmem>>, %arg6: memref<1x128xf32, #tpu.memory_space<vmem>>) attributes {dimension_semantics = [#tpu.dimension_semantics<parallel>], iteration_bounds = array<i64: 1>, scalar_prefetch = 0 : i64, scratch_operands = 0 : i64, tpu.core_type = #tpu.core_type<tc>, window_params = [{transform_indices = @transform_0, window_bounds = array<i64: 8, 128>}, {pipeline_mode = #tpu.pipeline_mode<synchronous>, transform_indices = @transform_1, window_bounds = array<i64: 16, 8>}, {pipeline_mode = #tpu.pipeline_mode<synchronous>, transform_indices = @transform_2, window_bounds = array<i64: 16, 1>}, {pipeline_mode = #tpu.pipeline_mode<synchronous>, transform_indices = @transform_3, window_bounds = array<i64: 16, 1>}, {pipeline_mode = #tpu.pipeline_mode<synchronous>, transform_indices = @transform_4, window_bounds = array<i64: 1, 1>}, {transform_indices = @transform_5, window_bounds = array<i64: 1, 128>}]} {
    %c0 = arith.constant 0 : index
    %c0_0 = arith.constant 0 : index
    %0 = vector.load %arg1[%c0, %c0_0] : memref<8x128xf32, #tpu.memory_space<vmem>>, vector<8x128xf32>
    %c0_1 = arith.constant 0 : index
    %c0_2 = arith.constant 0 : index
    %1 = vector.load %arg2[%c0_1, %c0_2] : memref<16x8xf32, #tpu.memory_space<vmem>>, vector<16x8xf32>
    %cst = arith.constant dense<0.000000e+00> : vector<16x128xf32>
    %2 = tpu.matmul %1, %0, %cst {dimension_numbers = #tpu.dot_dimension_numbers<[1], [0], [0], [1], [0, 0, 1, 1], [], []>} : vector<16x8xf32>, vector<8x128xf32>, vector<16x128xf32> -> vector<16x128xf32>
    %c0_3 = arith.constant 0 : index
    %c0_4 = arith.constant 0 : index
    %3 = vector.load %arg3[%c0_3, %c0_4] : memref<16x1xf32, #tpu.memory_space<vmem>>, vector<16x1xf32>
    %4 = vector.broadcast %3 : vector<16x1xf32> to vector<16x128xf32>
    %5 = arith.addf %2, %4 : vector<16x128xf32>
    %cst_5 = arith.constant 2.000000e-01 : f32
    %6 = vector.broadcast %cst_5 : f32 to vector<16x128xf32>
    %7 = arith.mulf %6, %5 : vector<16x128xf32>
    %8 = arith.maximumf %5, %7 : vector<16x128xf32>
    %c0_6 = arith.constant 0 : index
    %c0_7 = arith.constant 0 : index
    %9 = vector.load %arg4[%c0_6, %c0_7] : memref<16x1xf32, #tpu.memory_space<vmem>>, vector<16x1xf32>
    %10 = vector.broadcast %9 : vector<16x1xf32> to vector<16x128xf32>
    %11 = arith.mulf %10, %8 : vector<16x128xf32>
    %cst_8 = arith.constant dense<0.000000e+00> : vector<128xf32>
    %12 = vector.multi_reduction <add>, %11, %cst_8 [0] : vector<16x128xf32> to vector<128xf32>
    %13 = vector.shape_cast %12 : vector<128xf32> to vector<1x128xf32>
    %c0_9 = arith.constant 0 : index
    %c0_10 = arith.constant 0 : index
    %14 = vector.load %arg5[%c0_9, %c0_10] : memref<1x1xf32, #tpu.memory_space<vmem>>, vector<1x1xf32>
    %15 = vector.broadcast %14 : vector<1x1xf32> to vector<1x128xf32>
    %16 = arith.addf %13, %15 : vector<1x128xf32>
    %17 = arith.negf %16 : vector<1x128xf32>
    %18 = math.exp %17 : vector<1x128xf32>
    %cst_11 = arith.constant 1.000000e+00 : f32
    %19 = vector.broadcast %cst_11 : f32 to vector<1x128xf32>
    %20 = arith.addf %19, %18 : vector<1x128xf32>
    %21 = arith.divf %19, %20 : vector<1x128xf32>
    %c0_12 = arith.constant 0 : index
    %c0_13 = arith.constant 0 : index
    %22 = vector.load %arg6[%c0_12, %c0_13] : memref<1x128xf32, #tpu.memory_space<vmem>>, vector<1x128xf32>
    tpu.vector_store %arg6[%c0_12, %c0_13], %21 {strides = array<i32>} : memref<1x128xf32, #tpu.memory_space<vmem>>, vector<1x128xf32>,
    return
  }
  func.func @transform_0(%arg0: i32) -> (i32, i32) {
    %c0_i32 = arith.constant 0 : i32
    %c0_i32_0 = arith.constant 0 : i32
    return %c0_i32, %arg0 : i32, i32
  }
  func.func @transform_1(%arg0: i32) -> (i32, i32) {
    %c0_i32 = arith.constant 0 : i32
    %c0_i32_0 = arith.constant 0 : i32
    %c0_i32_1 = arith.constant 0 : i32
    return %c0_i32, %c0_i32_0 : i32, i32
  }
  func.func @transform_2(%arg0: i32) -> (i32, i32) {
    %c0_i32 = arith.constant 0 : i32
    %c0_i32_0 = arith.constant 0 : i32
    %c0_i32_1 = arith.constant 0 : i32
    return %c0_i32, %c0_i32_0 : i32, i32
  }
  func.func @transform_3(%arg0: i32) -> (i32, i32) {
    %c0_i32 = arith.constant 0 : i32
    %c0_i32_0 = arith.constant 0 : i32
    %c0_i32_1 = arith.constant 0 : i32
    return %c0_i32, %c0_i32_0 : i32, i32
  }
  func.func @transform_4(%arg0: i32) -> (i32, i32) {
    %c0_i32 = arith.constant 0 : i32
    %c0_i32_0 = arith.constant 0 : i32
    %c0_i32_1 = arith.constant 0 : i32
    return %c0_i32, %c0_i32_0 : i32, i32
  }
  func.func @transform_5(%arg0: i32) -> (i32, i32) {
    %c0_i32 = arith.constant 0 : i32
    %c0_i32_0 = arith.constant 0 : i32
    return %c0_i32, %arg0 : i32, i32
  }
}

</mosaic_0001>

<llo_original>
// kernel: tpu_custom_call.1
$region0: #{tpu_custom_call.1}
  #allocation0 [shape = 'u32[]', space=smem, size = 0x4, offset = 0x4, fixed_abs, tag = 'smem constant byte address 0x4 - core index']
  #allocation1 [shape = 'u32[144,128]{1,0:T(1,128)}', space=vmem, size = 0x12000, scoped, tag = 'internal scratch']
  #allocation2 [shape = 'f32[1,1]{1,0:T(1,128)S(1)}', space=vmem, size = 0x200, scoped, tag = 'scoped memory for tpu_custom_call.1']
  %s0 = inlined_call_operand.vmem [shape: f32[8,128], index: 0, kind: input, shape index: {}]
  %s1 = inlined_call_operand.vmem [shape: f32[16,8], index: 1, kind: input, shape index: {}]
  %s2 = inlined_call_operand.vmem [shape: f32[16,1], index: 2, kind: input, shape index: {}]
  %s3 = inlined_call_operand.vmem [shape: f32[16,1], index: 3, kind: input, shape index: {}]
  %s4 = inlined_call_operand.<no memory space> [shape: f32[1,1], index: 4, kind: input, shape index: {}]
  %s5 = inlined_call_operand.hbm [shape: f32[1,128], index: 5, kind: output, shape index: {}]
  %s6 = sld [smem:[#allocation0]]
  $region30: #{tpu_custom_call.1} parent=0
    _
  %s8 = ssub.s32 1, %s6
  %s9 = scalar_select 0, %s8, %s6
  %v10 = vstv %s4
  %11 = vst [vmem:[#allocation2] sm:$0x1] %v10
  $region1: #{tpu_custom_call.1} parent=0
    #allocation3 [shape = 'u8[512]{0}', space=vmem, size = 0x400, scoped, tag = 'output window, operand 0, single buffered']
    #allocation4 [shape = 's32[1]{0}', space=sflag, size = 0x4, scoped, tag = 'scoped memory for tpu_custom_call.1']
    %12 = vsyncpa [#allocation4], 0
    // Predicated region
    $region2: #{tpu_custom_call.1} parent=1 // pred_check
      _
    $region3: #{tpu_custom_call.1} parent=1 // pred_check_branch
      %14 = sbr.rel (0) target = $region5
    $region4: #{tpu_custom_call.1} parent=1 // pred_region
      _
    $region5: #{tpu_custom_call.1} parent=1 // pred_fallthru
      _
    // Predicated region
    $region6: #{tpu_custom_call.1} parent=1 // pred_check
      _
    $region7: #{tpu_custom_call.1} parent=1 // pred_check_branch
      %16 = sbr.rel (0) target = $region9
    $region8: #{tpu_custom_call.1} parent=1 // pred_region
      _
    $region9: #{tpu_custom_call.1} parent=1 // pred_fallthru
      _
    // Predicated region
    $region10: #{tpu_custom_call.1} parent=1 // pred_check
      _
    $region11: #{tpu_custom_call.1} parent=1 // pred_check_branch
      %18 = sbr.rel (0) target = $region13
    $region12: #{tpu_custom_call.1} parent=1 // pred_region
      _
    $region13: #{tpu_custom_call.1} parent=1 // pred_fallthru
      _
    // Predicated region
    $region14: #{tpu_custom_call.1} parent=1 // pred_check
      _
    $region15: #{tpu_custom_call.1} parent=1 // pred_check_branch
      %20 = sbr.rel (0) target = $region17
    $region16: #{tpu_custom_call.1} parent=1 // pred_region
      _
    $region17: #{tpu_custom_call.1} parent=1 // pred_fallthru
      _
    // Predicated region
    $region18: #{tpu_custom_call.1} parent=1 // pred_check
      _
    $region19: #{tpu_custom_call.1} parent=1 // pred_check_branch
      %22 = sbr.rel (0) target = $region21
    $region20: #{tpu_custom_call.1} parent=1 // pred_region
      _
    $region21: #{tpu_custom_call.1} parent=1 // pred_fallthru
      _
    %v23 = vld [vmem:[%s0] sm:$0xff]
    %v24 = vld [vmem:[%s1] sm:$0xff]
    %v25 = vld [vmem:[%s1 + $0x8] sm:$0xff]
    %v26 = vld [vmem:[%s2] sm:$0xff]
    %v27 = vld [vmem:[%s2 + $0x8] sm:$0xff]
    %29 = vset.pattern.permute.xlu0 0
    %30 = vperm.xlu0 %29, %v26
    %v31 = vpop.permute.xlu0 %30
    %34 = vset.pattern.permute.xlu0 0
    %35 = vperm.xlu0 %34, %v27
    %v36 = vpop.permute.xlu0 %35
    %vm38 = vcmask 64512
    %v40 = vsel %vm38, %v24, 0
    %v43 = vsel %vm38, %v25, 0
    %45 = vmatprep.subr.mxu0 0.0
    %46 = vmatpush1.msra.mxu0 %v23
    %47 = vmatprep.subr.mxu0 0.0
    %48 = vmatpush1.msra.mxu0 0.0
    %49 = vmatprep.subr.mxu0 0.0
    %50 = vmatpush1.msra.mxu0 0.0
    %51 = vmatprep.subr.mxu0 0.0
    %52 = vmatpush1.msra.mxu0 0.0
    %53 = vmatprep.subr.mxu0 0.0
    %54 = vmatpush1.msra.mxu0 0.0
    %55 = vmatprep.subr.mxu0 0.0
    %56 = vmatpush1.msra.mxu0 0.0
    %57 = vmatprep.subr.mxu0 0.0
    %58 = vmatpush1.msra.mxu0 0.0
    %59 = vmatprep.subr.mxu0 0.0
    %60 = vmatpush1.msra.mxu0 0.0
    %61 = vmatprep.subr.mxu0 0.0
    %62 = vmatpush1.msra.mxu0 0.0
    %63 = vmatprep.subr.mxu0 0.0
    %64 = vmatpush1.msra.mxu0 0.0
    %65 = vmatprep.subr.mxu0 0.0
    %66 = vmatpush1.msra.mxu0 0.0
    %67 = vmatprep.subr.mxu0 0.0
    %68 = vmatpush1.msra.mxu0 0.0
    %69 = vmatprep.subr.mxu0 0.0
    %70 = vmatpush1.msra.mxu0 0.0
    %71 = vmatprep.subr.mxu0 0.0
    %72 = vmatpush1.msra.mxu0 0.0
    %73 = vmatprep.subr.mxu0 0.0
    %74 = vmatpush1.msra.mxu0 0.0
    %75 = vmatprep.subr.mxu0 0.0
    %76 = vmatpush1.msra.mxu0 0.0
    %77 = vmatprep.subr.mxu0 0.0
    %78 = vmatpush1.msra.mxu0 0.0
    %79 = vmatprep.subr.mxu0 0.0
    %80 = vmatpush1.msra.mxu0 0.0
    %81 = vmatprep.subr.mxu0 0.0
    %82 = vmatpush1.msra.mxu0 0.0
    %83 = vmatprep.subr.mxu0 0.0
    %84 = vmatpush1.msra.mxu0 0.0
    %85 = vmatprep.subr.mxu0 0.0
    %86 = vmatpush1.msra.mxu0 0.0
    %87 = vmatprep.subr.mxu0 0.0
    %88 = vmatpush1.msra.mxu0 0.0
    %89 = vmatprep.subr.mxu0 0.0
    %90 = vmatpush1.msra.mxu0 0.0
    %91 = vmatprep.subr.mxu0 0.0
    %92 = vmatpush1.msra.mxu0 0.0
    %93 = vmatprep.subr.mxu0 0.0
    %94 = vmatpush1.msra.mxu0 0.0
    %95 = vmatprep.subr.mxu0 0.0
    %96 = vmatpush1.msra.mxu0 0.0
    %97 = vmatprep.subr.mxu0 0.0
    %98 = vmatpush1.msra.mxu0 0.0
    %99 = vmatprep.subr.mxu0 0.0
    %100 = vmatpush1.msra.mxu0 0.0
    %101 = vmatprep.subr.mxu0 0.0
    %102 = vmatpush1.msra.mxu0 0.0
    %103 = vmatprep.subr.mxu0 0.0
    %104 = vmatpush1.msra.mxu0 0.0
    %105 = vmatprep.subr.mxu0 0.0
    %106 = vmatpush1.msra.mxu0 0.0
    %107 = vmatprep.subr.mxu0 0.0
    %108 = vmatpush1.msra.mxu0 0.0
    %109 = vmatprep.mubr.f32.mxu0 0.0
    %110 = vmatmul.mubr.f32.gmra.mrb[0].mxu0 %v40
    %v111 = vpop.f32.mrb[0].mxu0
    %v112 = vadd.f32 %v31, %v111
    %v113 = vpop.f32.mrb[0].mxu0
    %114 = vmatprep.mubr.f32.mxu0 0.0
    %115 = vmatmul.mubr.f32.gmra.mrb[0].mxu0 %v43
    %v116 = vpop.f32.mrb[0].mxu0
    %v117 = vadd.f32 %v36, %v116
    %v118 = vpop.f32.mrb[0].mxu0
    %119 = vdwg.mxu0
    %v120 = vmul.f32 %v112, 0.2
    %v121 = vmul.f32 %v117, 0.2
    %v122 = vmax.f32 %v112, %v120
    %v123 = vmax.f32 %v117, %v121
    %v124 = vld [vmem:[%s3] sm:$0xff]
    %v125 = vld [vmem:[%s3 + $0x8] sm:$0xff]
    %127 = vset.pattern.permute.xlu0 0
    %128 = vperm.xlu0 %127, %v124
    %v129 = vpop.permute.xlu0 %128
    %132 = vset.pattern.permute.xlu0 0
    %133 = vperm.xlu0 %132, %v125
    %v134 = vpop.permute.xlu0 %133
    %v136 = vmul.f32 %v129, %v122
    %v137 = vmul.f32 %v134, %v123
    %v138 = vadd.f32 %v136, %v137
    %v139 = vrot.slane %v138, 4
    %v140 = vadd.f32 %v138, %v139
    %v141 = vrot.slane %v140, 2
    %v142 = vadd.f32 %v140, %v141
    %v143 = vrot.slane %v142, 1
    %v144 = vadd.f32 %v142, %v143
    %v145 = vld [vmem:[#allocation2] sm:$0x1]
    %147 = vset.pattern.permute.xlu0 0
    %148 = vperm.xlu0 %147, %v145
    %v149 = vpop.permute.xlu0 %148
    %v151 = vlaneseq
    %v152 = vshrl.u32 %v151, 7
    %v153 = vsub.s32 0, %v152
    %v154 = vrot.slane %v149, %v153
    %v155 = vadd.f32 %v144, %v154
    %v156 = vxor.u32 %v155, 2147483648
    %v157 = vmul.f32 %v156, 1.442695
    %v158 = vpow.pop %v157
    %v159 = vadd.f32 %v158, 1.0
    %v160 = vrcp.pop %v159
    %v161 = vmul.f32 1.0, %v160
    %162 = vst [vmem:[#allocation3] sm:$0x1] %v161
    // Predicated region
    $region22: #{tpu_custom_call.1} parent=1 // pred_check
      _
    $region23: #{tpu_custom_call.1} parent=1 // pred_check_branch
      %164 = sbr.rel (0) target = $region25
    $region24: #{tpu_custom_call.1} parent=1 // pred_region
      %s166 = ssub.s32 16, 16
      %167 = vsyncadd [#allocation4], %s166
      %s169 = sshll.u32 [#allocation3], 4
      %s170 = int_to_ptr.vmem [resolvable:$true] %s169
      %172 = dma.vmem_to_hbm [thread:$0]  %s170, 16, %s5, [#allocation4]
    $region25: #{tpu_custom_call.1} parent=1 // pred_fallthru
      _
    // Predicated region
    $region26: #{tpu_custom_call.1} parent=1 // pred_check
      _
    $region27: #{tpu_custom_call.1} parent=1 // pred_check_branch
      %174 = sbr.rel (0) target = $region29
    $region28: #{tpu_custom_call.1} parent=1 // pred_region
      %175 = dma.done [#allocation4], 16
    $region29: #{tpu_custom_call.1} parent=1 // pred_fallthru
      _
    %176 = vsyncpa [#allocation4], 1

</llo_original>
